<compile_context>
chip_gen: v7x
topology: tpu7x:2x2x1
jax: 0.10.0
libtpu: 0.0.40
codegen_flags: <defaults>
</compile_context>

<pallas_src>
import functools

import numpy as np
import jax
import jax.numpy as jnp
from jax import lax
from jax.experimental import pallas as pl
from jax.experimental.pallas import tpu as pltpu

_MIB = 1024 * 1024


# ----------------------------------------------------------------------------
# Budget / tiling helpers (host side, static).
# ----------------------------------------------------------------------------
def _vmem_budget_bytes():
    """Generation-aware scoped-VMEM budget: half of physical VMEM, capped at 64 MiB.
    (v5e/v6e: 128 MiB physical -> 64 MiB budget; v7x: 64 MiB physical -> 32 MiB.)"""
    try:
        phys = int(pltpu.get_tpu_info().vmem_capacity_bytes)
    except Exception:
        phys = 64 * _MIB                      # v7x-safe fallback
    if phys <= 0:
        phys = 64 * _MIB
    return int(min(phys // 2, 64 * _MIB))


def _fused_fits(hw, c, itemsize, budget):
    """Whole-image (1, C, HW) in + out blocks, double-buffered, must fit VMEM."""
    per_image = c * hw * itemsize
    return 4 * per_image + 512 * 1024 <= int(0.75 * budget)


def _pick_stream_tiles(hw, c, itemsize, budget):
    """(pass-1 tile, pass-2 tile) lane widths for the streaming path.

    Pass 2 keeps 4 blocks live (in + out, double-buffered); pass 1 only 2 (its
    output is a tiny once-per-image (C, 1)), so it gets ~2x the lane width
    within the same VMEM budget."""
    def tile_for(per_block_bytes):
        t = per_block_bytes // max(1, c * itemsize)
        t = max(128, (t // 128) * 128)        # lane-dense multiples of 128
        if t >= hw:
            return hw                          # full-extent minor dim: single block
        return t
    return tile_for(budget // 4), tile_for(budget // 8)


# ----------------------------------------------------------------------------
# Kernels.
# ----------------------------------------------------------------------------
def _se_fused_kernel(x_ref, w1_ref, b1_ref, w2_ref, b2_ref, o_ref, mean_ref):
    """One image per grid step: pool -> fc1/relu/fc2(even rows)/sigmoid -> scale."""
    xv = x_ref[...]                                            # (1, C, HW) native dtype
    xs = xv[0].astype(jnp.float32)                             # f32 accumulation (v5e: no bf16 VPU)
    pooled = jnp.sum(xs, axis=1, keepdims=True)                # (C, 1); 1/HW folded into w1
    h = jnp.dot(w1_ref[...], pooled, preferred_element_type=jnp.float32) + b1_ref[...]
    h = jnp.maximum(h, 0.0)                                    # (C_mid, 1)
    m = jax.nn.sigmoid(jnp.dot(w2_ref[...], h, preferred_element_type=jnp.float32)
                       + b2_ref[...])                          # (C, 1) mean head only
    mean_ref[...] = m[None]                                    # (1, C, 1) f32
    # Native-dtype scale (bf16 stays bf16 on v6e/v7x; Mosaic legalizes on v5e).
    o_ref[...] = xv * m[None].astype(xv.dtype)


def _pool_kernel(x_ref, pooled_ref, acc_ref, *, hw):
    """Streaming global-sum pool into a (C, 128) VPU accumulator."""
    t = pl.program_id(1)

    @pl.when(t == 0)
    def _init():
        acc_ref[...] = jnp.zeros_like(acc_ref)

    xs = x_ref[...][0].astype(jnp.float32)                     # (C, TILE)
    tile = xs.shape[1]
    if hw % tile != 0:
        # Masked partial last tile: zero lanes past the true spatial extent.
        col = t * tile + lax.broadcasted_iota(jnp.int32, xs.shape, 1)
        xs = jnp.where(col < hw, xs, 0.0)

    # Lane-strided accumulation (pure VPU adds); the single cross-lane XLU
    # reduce happens once per image in the finalize branch below.
    n_full = tile // 128
    for j in range(n_full):
        acc_ref[...] += xs[:, j * 128:(j + 1) * 128]
    rem = tile - n_full * 128
    if rem:
        acc_ref[:, :rem] += xs[:, n_full * 128:]

    @pl.when(t == pl.num_programs(1) - 1)
    def _finalize():
        pooled_ref[...] = jnp.sum(acc_ref[...], axis=-1, keepdims=True)[None]  # (1, C, 1)


def _scale_kernel(x_ref, mean_ref, o_ref):
    """out = x * mean, broadcast over the spatial (lane) axis, native dtype."""
    o_ref[...] = x_ref[...] * mean_ref[...]


# ----------------------------------------------------------------------------
# pallas_call wrappers.
# ----------------------------------------------------------------------------
@functools.partial(jax.jit, static_argnames=("vmem_limit",))
def _se_fused(x3, w1m, b1m, w2m, b2m, *, vmem_limit):
    B, C, HW = x3.shape
    C_mid = w1m.shape[0]
    itemsize = x3.dtype.itemsize
    bytes_x = B * C * HW * itemsize

    out3, mean = pl.pallas_call(
        _se_fused_kernel,
        out_shape=(jax.ShapeDtypeStruct((B, C, HW), x3.dtype),
                   jax.ShapeDtypeStruct((B, C, 1), jnp.float32)),
        grid_spec=pltpu.PrefetchScalarGridSpec(
            num_scalar_prefetch=0,
            grid=(B,),
            in_specs=[
                pl.BlockSpec((1, C, HW), lambda b: (b, 0, 0)),
                pl.BlockSpec((C_mid, C), lambda b: (0, 0)),
                pl.BlockSpec((C_mid, 1), lambda b: (0, 0)),
                pl.BlockSpec((C, C_mid), lambda b: (0, 0)),
                pl.BlockSpec((C, 1), lambda b: (0, 0)),
            ],
            out_specs=(
                pl.BlockSpec((1, C, HW), lambda b: (b, 0, 0)),
                pl.BlockSpec((1, C, 1), lambda b: (b, 0, 0)),
            ),
        ),
        compiler_params=pltpu.CompilerParams(
            dimension_semantics=("parallel",),
            vmem_limit_bytes=vmem_limit,
        ),
        cost_estimate=pl.CostEstimate(
            flops=3 * B * C * HW + 4 * B * C_mid * C,
            transcendentals=B * C,
            bytes_accessed=2 * bytes_x + 8 * B * C,
        ),
    )(x3, w1m, b1m, w2m, b2m)
    return out3, mean


@functools.partial(jax.jit, static_argnames=("tile1", "tile2", "vmem_limit"))
def _se_streaming(x3, w1m, b1m, w2m, b2m, *, tile1, tile2, vmem_limit):
    B, C, HW = x3.shape
    itemsize = x3.dtype.itemsize
    n1 = pl.cdiv(HW, tile1)
    n2 = pl.cdiv(HW, tile2)

    # Pass 1: streaming global-sum pool -> (B, C, 1) raw spatial sums (f32).
    pooled = pl.pallas_call(
        functools.partial(_pool_kernel, hw=HW),
        out_shape=jax.ShapeDtypeStruct((B, C, 1), jnp.float32),
        grid_spec=pltpu.PrefetchScalarGridSpec(
            num_scalar_prefetch=0,
            grid=(B, n1),
            in_specs=[pl.BlockSpec((1, C, tile1), lambda b, t: (b, 0, t))],
            out_specs=pl.BlockSpec((1, C, 1), lambda b, t: (b, 0, 0)),
            scratch_shapes=[pltpu.VMEM((C, 128), jnp.float32)],
        ),
        compiler_params=pltpu.CompilerParams(
            dimension_semantics=("parallel", "arbitrary"),
            vmem_limit_bytes=vmem_limit,
        ),
        cost_estimate=pl.CostEstimate(
            flops=B * C * HW, transcendentals=0,
            bytes_accessed=B * C * HW * itemsize + 4 * B * C),
    )(x3)

    # Batched FC head (tiny (B,C) matmul pair): B lanes on the MXU instead of B
    # per-image N=1 matmuls, and it keeps matmuls out of the streaming finalize.
    p = pooled[:, :, 0]                                        # (B, C) raw sums
    h = jnp.maximum(p @ w1m.T + b1m.T, 0.0)                    # (B, C_mid); 1/HW folded in w1m
    mean2d = jax.nn.sigmoid(h @ w2m.T + b2m.T)                 # (B, C) mean head
    mean = mean2d[:, :, None].astype(jnp.float32)              # (B, C, 1)
    mean_x = mean.astype(x3.dtype)                             # cast once -> native-dtype multiply

    # Pass 2: streaming elementwise scale (lane-dense blocks, no aliasing).
    out3 = pl.pallas_call(
        _scale_kernel,
        out_shape=jax.ShapeDtypeStruct((B, C, HW), x3.dtype),
        grid_spec=pltpu.PrefetchScalarGridSpec(
            num_scalar_prefetch=0,
            grid=(B, n2),
            in_specs=[pl.BlockSpec((1, C, tile2), lambda b, t: (b, 0, t)),
                      pl.BlockSpec((1, C, 1), lambda b, t: (b, 0, 0))],
            out_specs=pl.BlockSpec((1, C, tile2), lambda b, t: (b, 0, t)),
        ),
        compiler_params=pltpu.CompilerParams(
            dimension_semantics=("parallel", "parallel"),
            vmem_limit_bytes=vmem_limit,
        ),
        cost_estimate=pl.CostEstimate(
            flops=B * C * HW, transcendentals=0,
            bytes_accessed=2 * B * C * HW * itemsize + B * C * itemsize),
    )(x3, mean_x)
    return out3, mean


# ----------------------------------------------------------------------------
# Public forward.
# ----------------------------------------------------------------------------
def se_module_forward(x, params, frequency_index=0, *, force_streaming=False,
                      stream_tile=None):
    """Eval-mode SEModule forward: returns (x * mean, mean), matching PyTorch.

    frequency_index only selects a detached target tensor in eval mode (it is
    never returned), so it has no effect on the outputs.
    """
    del frequency_index
    B, C, H, W = x.shape
    w1, b1, w2, b2 = params                        # 1x1 conv weights (out, in, 1, 1)
    C_mid = w1.shape[0]
    HW = H * W
    itemsize = np.dtype(x.dtype).itemsize
    x3 = x.reshape(B, C, HW)

    # Host-side parameter glue: 1x1 conv -> matmul weights; fold the 1/HW pooling
    # divide into fc1; keep only the even ("mean") rows of fc2 -- the odd ("std")
    # rows never contribute to the eval forward outputs.
    w1m = (jnp.asarray(w1).reshape(C_mid, C) / HW).astype(jnp.float32)   # (C_mid, C)
    b1m = jnp.asarray(b1).reshape(C_mid, 1).astype(jnp.float32)          # (C_mid, 1)
    w2m = jnp.asarray(w2).reshape(-1, C_mid)[::2].astype(jnp.float32)    # (C, C_mid)
    b2m = jnp.asarray(b2)[::2].reshape(C, 1).astype(jnp.float32)         # (C, 1)

    budget = _vmem_budget_bytes()

    if (not force_streaming) and _fused_fits(HW, C, itemsize, budget):
        out3, mean = _se_fused(x3, w1m, b1m, w2m, b2m, vmem_limit=budget)
    else:
        tile1, tile2 = _pick_stream_tiles(HW, C, itemsize, budget)
        if stream_tile is not None:
            tile1 = tile2 = int(stream_tile)
        out3, mean = _se_streaming(x3, w1m, b1m, w2m, b2m,
                                   tile1=tile1, tile2=tile2, vmem_limit=budget)

    out = out3.reshape(B, C, H, W)
    mean4 = mean.reshape(B, C, 1, 1).astype(x.dtype)
    return out, mean4


if __name__ == "__main__":
    key = jax.random.PRNGKey(0)
    B, C, H, W = 2, 16, 16, 16
    C_mid = 16            # channels // reduction with reduction_=10 -> reduction=1
    C2 = 2 * C            # fc2 output channels

    k1, k2, k3, k4, k5 = jax.random.split(key, 5)
    w1 = jax.random.normal(k1, (C_mid, C, 1, 1), jnp.float32) * 0.1
    b1 = jax.random.normal(k2, (C_mid,), jnp.float32) * 0.1
    w2 = jax.random.normal(k3, (C2, C_mid, 1, 1), jnp.float32) * 0.1
    b2 = jax.random.normal(k4, (C2,), jnp.float32) * 0.1
    x = jax.random.normal(k5, (B, C, H, W), jnp.float32)

    def reference(xf):
        pooled = xf.mean(axis=(2, 3))
        h = jnp.maximum(pooled @ w1.reshape(C_mid, C).T + b1, 0.0)
        s = jax.nn.sigmoid(h @ w2.reshape(C2, C_mid).T + b2)
        mean_r = s[:, ::2]
        return xf * mean_r[:, :, None, None], mean_r

    out_r, mean_r = reference(x)

    # 1) fused single-pass path (one image easily fits VMEM): x read from HBM once.
    out, mean = se_module_forward(x, (w1, b1, w2, b2), frequency_index=0)
    jax.block_until_ready((out, mean))
    assert np.allclose(np.asarray(out), np.asarray(out_r), atol=1e-5)
    assert np.allclose(np.asarray(mean[:, :, 0, 0]), np.asarray(mean_r), atol=1e-5)

    # 2) forced streaming two-pass path, 128-wide tiles (HW=256 -> 2 tiles/image):
    #    exercises the pl.when accumulate/finalize and the batched FC head.
    out2, mean2 = se_module_forward(x, (w1, b1, w2, b2), frequency_index=0,
                                    force_streaming=True, stream_tile=128)
    jax.block_until_ready((out2, mean2))
    assert np.allclose(np.asarray(out2), np.asarray(out_r), atol=1e-5)
    assert np.allclose(np.asarray(mean2[:, :, 0, 0]), np.asarray(mean_r), atol=1e-5)

    # 3) forced streaming on a non-128-divisible spatial size (12x12 = 144):
    #    exercises the masked partial last tile in pass 1 and dropped OOB writes
    #    in pass 2.
    xb = jax.random.normal(jax.random.PRNGKey(1), (B, C, 12, 12), jnp.float32)
    out_rb, mean_rb = reference(xb)
    out3_, mean3_ = se_module_forward(xb, (w1, b1, w2, b2), frequency_index=0,
                                      force_streaming=True, stream_tile=128)
    jax.block_until_ready((out3_, mean3_))
    assert np.allclose(np.asarray(out3_), np.asarray(out_rb), atol=1e-5)
    assert np.allclose(np.asarray(mean3_[:, :, 0, 0]), np.asarray(mean_rb), atol=1e-5)

    # 4) bf16 input on the fused path: native-dtype scale multiply.
    xbf = x.astype(jnp.bfloat16)
    out4, mean4b = se_module_forward(xbf, (w1, b1, w2, b2), frequency_index=0)
    jax.block_until_ready((out4, mean4b))
    out_r4, _ = reference(xbf.astype(jnp.float32))
    assert np.allclose(np.asarray(out4.astype(jnp.float32)), np.asarray(out_r4),
                       atol=5e-2, rtol=5e-2)

    # TODO(synk): training-branch Gaussian NLL / MSE loss (_gaussian_dist_pdf) and
    # the mean_analysis/std_analysis side buffers are host-side bookkeeping, not
    # part of the eval forward outputs; not implemented in-kernel.
    print("KERNEL_OK")
</pallas_src>

<mosaic_0001>
module attributes {stable_mosaic.version = 11 : i64} {
  func.func @_se_fused_kernel(%arg0: i32, %arg1: memref<1x16x256xf32, #tpu.memory_space<vmem>>, %arg2: memref<16x16xf32, #tpu.memory_space<vmem>>, %arg3: memref<16x1xf32, #tpu.memory_space<vmem>>, %arg4: memref<16x16xf32, #tpu.memory_space<vmem>>, %arg5: memref<16x1xf32, #tpu.memory_space<vmem>>, %arg6: memref<1x16x256xf32, #tpu.memory_space<vmem>>, %arg7: memref<1x16x1xf32, #tpu.memory_space<vmem>>) attributes {dimension_semantics = [#tpu.dimension_semantics<parallel>], iteration_bounds = array<i64: 2>, scalar_prefetch = 0 : i64, scratch_operands = 0 : i64, tpu.core_type = #tpu.core_type<tc>, window_params = [{transform_indices = @transform_0, window_bounds = array<i64: 1, 16, 256>}, {pipeline_mode = #tpu.pipeline_mode<synchronous>, transform_indices = @transform_1, window_bounds = array<i64: 16, 16>}, {pipeline_mode = #tpu.pipeline_mode<synchronous>, transform_indices = @transform_2, window_bounds = array<i64: 16, 1>}, {pipeline_mode = #tpu.pipeline_mode<synchronous>, transform_indices = @transform_3, window_bounds = array<i64: 16, 16>}, {pipeline_mode = #tpu.pipeline_mode<synchronous>, transform_indices = @transform_4, window_bounds = array<i64: 16, 1>}, {transform_indices = @transform_5, window_bounds = array<i64: 1, 16, 256>}, {transform_indices = @transform_6, window_bounds = array<i64: 1, 16, 1>}]} {
    %c0 = arith.constant 0 : index
    %c0_0 = arith.constant 0 : index
    %c0_1 = arith.constant 0 : index
    %0 = vector.load %arg1[%c0, %c0_0, %c0_1] : memref<1x16x256xf32, #tpu.memory_space<vmem>>, vector<1x16x256xf32>
    %1 = vector.shape_cast %0 : vector<1x16x256xf32> to vector<16x256xf32>
    %cst = arith.constant dense<0.000000e+00> : vector<16xf32>
    %2 = vector.multi_reduction <add>, %1, %cst [1] : vector<16x256xf32> to vector<16xf32>
    %3 = vector.shape_cast %2 : vector<16xf32> to vector<16x1xf32>
    %c0_2 = arith.constant 0 : index
    %c0_3 = arith.constant 0 : index
    %4 = vector.load %arg2[%c0_2, %c0_3] : memref<16x16xf32, #tpu.memory_space<vmem>>, vector<16x16xf32>
    %cst_4 = arith.constant dense<0.000000e+00> : vector<16x1xf32>
    %5 = tpu.matmul %4, %3, %cst_4 {dimension_numbers = #tpu.dot_dimension_numbers<[1], [0], [0], [1], [0, 0, 1, 1], [], []>} : vector<16x16xf32>, vector<16x1xf32>, vector<16x1xf32> -> vector<16x1xf32>
    %c0_5 = arith.constant 0 : index
    %c0_6 = arith.constant 0 : index
    %6 = vector.load %arg3[%c0_5, %c0_6] : memref<16x1xf32, #tpu.memory_space<vmem>>, vector<16x1xf32>
    %7 = arith.addf %5, %6 : vector<16x1xf32>
    %cst_7 = arith.constant 0.000000e+00 : f32
    %8 = vector.broadcast %cst_7 : f32 to vector<16x1xf32>
    %9 = arith.maximumf %7, %8 : vector<16x1xf32>
    %c0_8 = arith.constant 0 : index
    %c0_9 = arith.constant 0 : index
    %10 = vector.load %arg4[%c0_8, %c0_9] : memref<16x16xf32, #tpu.memory_space<vmem>>, vector<16x16xf32>
    %cst_10 = arith.constant dense<0.000000e+00> : vector<16x1xf32>
    %11 = tpu.matmul %10, %9, %cst_10 {dimension_numbers = #tpu.dot_dimension_numbers<[1], [0], [0], [1], [0, 0, 1, 1], [], []>} : vector<16x16xf32>, vector<16x1xf32>, vector<16x1xf32> -> vector<16x1xf32>
    %c0_11 = arith.constant 0 : index
    %c0_12 = arith.constant 0 : index
    %12 = vector.load %arg5[%c0_11, %c0_12] : memref<16x1xf32, #tpu.memory_space<vmem>>, vector<16x1xf32>
    %13 = arith.addf %11, %12 : vector<16x1xf32>
    %14 = arith.negf %13 : vector<16x1xf32>
    %15 = math.exp %14 : vector<16x1xf32>
    %cst_13 = arith.constant 1.000000e+00 : f32
    %16 = vector.broadcast %cst_13 : f32 to vector<16x1xf32>
    %17 = arith.addf %16, %15 : vector<16x1xf32>
    %18 = arith.divf %16, %17 : vector<16x1xf32>
    %19 = vector.shape_cast %18 : vector<16x1xf32> to vector<1x16x1xf32>
    %c0_14 = arith.constant 0 : index
    %c0_15 = arith.constant 0 : index
    %c0_16 = arith.constant 0 : index
    %20 = vector.load %arg7[%c0_14, %c0_15, %c0_16] : memref<1x16x1xf32, #tpu.memory_space<vmem>>, vector<1x16x1xf32>
    tpu.vector_store %arg7[%c0_14, %c0_15, %c0_16], %19 {strides = array<i32>} : memref<1x16x1xf32, #tpu.memory_space<vmem>>, vector<1x16x1xf32>,
    %21 = vector.shape_cast %18 : vector<16x1xf32> to vector<1x16x1xf32>
    %22 = vector.broadcast %21 : vector<1x16x1xf32> to vector<1x16x256xf32>
    %23 = arith.mulf %0, %22 : vector<1x16x256xf32>
    %c0_17 = arith.constant 0 : index
    %c0_18 = arith.constant 0 : index
    %c0_19 = arith.constant 0 : index
    %24 = vector.load %arg6[%c0_17, %c0_18, %c0_19] : memref<1x16x256xf32, #tpu.memory_space<vmem>>, vector<1x16x256xf32>
    tpu.vector_store %arg6[%c0_17, %c0_18, %c0_19], %23 {strides = array<i32>} : memref<1x16x256xf32, #tpu.memory_space<vmem>>, vector<1x16x256xf32>,
    return
  }
  func.func @transform_0(%arg0: i32) -> (i32, i32, i32) {
    %c0_i32 = arith.constant 0 : i32
    %c0_i32_0 = arith.constant 0 : i32
    %c0_i32_1 = arith.constant 0 : i32
    return %arg0, %c0_i32, %c0_i32_0 : i32, i32, i32
  }
  func.func @transform_1(%arg0: i32) -> (i32, i32) {
    %c0_i32 = arith.constant 0 : i32
    %c0_i32_0 = arith.constant 0 : i32
    %c0_i32_1 = arith.constant 0 : i32
    return %c0_i32, %c0_i32_0 : i32, i32
  }
  func.func @transform_2(%arg0: i32) -> (i32, i32) {
    %c0_i32 = arith.constant 0 : i32
    %c0_i32_0 = arith.constant 0 : i32
    %c0_i32_1 = arith.constant 0 : i32
    return %c0_i32, %c0_i32_0 : i32, i32
  }
  func.func @transform_3(%arg0: i32) -> (i32, i32) {
    %c0_i32 = arith.constant 0 : i32
    %c0_i32_0 = arith.constant 0 : i32
    %c0_i32_1 = arith.constant 0 : i32
    return %c0_i32, %c0_i32_0 : i32, i32
  }
  func.func @transform_4(%arg0: i32) -> (i32, i32) {
    %c0_i32 = arith.constant 0 : i32
    %c0_i32_0 = arith.constant 0 : i32
    %c0_i32_1 = arith.constant 0 : i32
    return %c0_i32, %c0_i32_0 : i32, i32
  }
  func.func @transform_5(%arg0: i32) -> (i32, i32, i32) {
    %c0_i32 = arith.constant 0 : i32
    %c0_i32_0 = arith.constant 0 : i32
    %c0_i32_1 = arith.constant 0 : i32
    return %arg0, %c0_i32, %c0_i32_0 : i32, i32, i32
  }
  func.func @transform_6(%arg0: i32) -> (i32, i32, i32) {
    %c0_i32 = arith.constant 0 : i32
    %c0_i32_0 = arith.constant 0 : i32
    %c0_i32_1 = arith.constant 0 : i32
    return %arg0, %c0_i32, %c0_i32_0 : i32, i32, i32
  }
}

</mosaic_0001>

<llo_original>
// kernel: _se_fused.1
$region0: #{_se_fused.1}
  #allocation0 [shape = 'u32[]', space=smem, size = 0x4, offset = 0x4, fixed_abs, tag = 'smem constant byte address 0x4 - core index']
  #allocation1 [shape = 'u32[144,128]{1,0:T(1,128)}', space=vmem, size = 0x12000, scoped, tag = 'internal scratch']
  %s0 = inlined_call_operand.hbm [shape: f32[2,16,256], index: 0, kind: input, shape index: {}]
  %s1 = inlined_call_operand.vmem [shape: f32[16,16], index: 1, kind: input, shape index: {}]
  %s2 = inlined_call_operand.vmem [shape: f32[16,1], index: 2, kind: input, shape index: {}]
  %s3 = inlined_call_operand.vmem [shape: f32[16,16], index: 3, kind: input, shape index: {}]
  %s4 = inlined_call_operand.vmem [shape: f32[16,1], index: 4, kind: input, shape index: {}]
  %s5 = inlined_call_operand.hbm [shape: f32[2,16,256], index: 5, kind: output, shape index: {0}]
  %s6 = inlined_call_operand.vmem [shape: f32[2,16,1], index: 6, kind: output, shape index: {1}]
  %7 = xla_tuple %s5, %s6
  %s8 = sld [smem:[#allocation0]]
  $region65: #{_se_fused.1} parent=0
    _
  %s10 = ssub.s32 1, %s8
  %s11 = scalar_select 0, %s10, %s8
  $region1: #{_se_fused.1} parent=0
    #allocation2 [shape = 'u8[32768]{0}', space=vmem, size = 0x8000, scoped, tag = 'input window, operand 0']
    #allocation3 [shape = 's32[2]{0}', space=sflag, size = 0x8, scoped, tag = 'scoped memory for _se_fused.1']
    #allocation4 [shape = 's32[2]{0}', space=sflag, size = 0x8, scoped, tag = 'scoped memory for _se_fused.1']
    #allocation5 [shape = 'u8[32768]{0}', space=vmem, size = 0x8000, scoped, tag = 'output window, operand 0']
    %12 = vsyncpa [#allocation3], 0
    %s13 = scalar_lea.sflag [#allocation3], 1
    %14 = vsyncpa %s13, 0
    %15 = vsyncpa [#allocation4], 0
    %s16 = scalar_lea.sflag [#allocation4], 1
    %17 = vsyncpa %s16, 0
    loop: start=0, step=1, limit=4
    $region2: #{_se_fused.1} parent=1 // loop_pre_header
      _
    $region3: #{_se_fused.1} parent=1 // loop_header
      %s19 = sphi 0, %s23
      %p20 = scmp.ge.s32.totalorder %s19, 4
      %s29 = sphi 0, %s31
      %s32 = sphi 0, %s29
      %s33 = sphi 0, %s32
      %s49 = sphi 0, %s33
      %s53 = sphi 0, %s53
      %s55 = sphi 0, %s53
      %s56 = sphi 0, %s55
      %s70 = sphi 0, %s56
      %s74 = sphi 0, %s74
      %s76 = sphi 0, %s74
      %s77 = sphi 0, %s76
      %s91 = sphi 0, %s77
      %s95 = sphi 0, %s95
      %s97 = sphi 0, %s95
      %s98 = sphi 0, %s97
      %s112 = sphi 0, %s98
      %s116 = sphi 0, %s116
      %s118 = sphi 0, %s116
      %s119 = sphi 0, %s118
      %s133 = sphi 0, %s119
      %s139 = sphi 0, %s141
      %s142 = sphi 0, %s139
      %s143 = sphi 0, %s142
      %s159 = sphi 0, %s143
      %s165 = sphi 0, %s167
      %s168 = sphi 0, %s165
      %s169 = sphi 0, %s168
      %s185 = sphi 0, %s169
    $region4: #{_se_fused.1} parent=1 // loop_header_branch
      %22 = sbr.rel (%p20) target = $region8
    $region5: #{_se_fused.1} parent=1 // loop_body
      %s24 = ssub.s32 %s19, 1
      %s25 = ssub.s32 %s19, 2
      %s26 = sadd.s32 %s19, 1
      %s27 = ssub.s32 %s19, %s26
      %p28 = scmp.eq.s32.totalorder %s27, 0
      %s30 = sadd.s32 %s29, 1
      %s31 = scalar_select %p28, %s29, %s30
      %p34 = pneg %p28
      %p35 = scmp.eq.s32.totalorder %s19, 1
      %p36 = por %p34, %p35
      %p37 = scmp.ne.s32.totalorder %s29, %s32
      %p38 = scmp.eq.s32.totalorder %s19, 0
      %p39 = por %p37, %p38
      %p40 = scmp.ne.s32.totalorder %s29, %s32
      %p41 = scmp.eq.s32.totalorder %s24, 1
      %p42 = por %p40, %p41
      %p43 = scmp.ne.s32.totalorder %s32, %s33
      %p44 = scmp.eq.s32.totalorder %s24, 0
      %p45 = por %p43, %p44
      %p46 = scmp.ne.s32.totalorder %s32, %s33
      %p47 = scmp.eq.s32.totalorder %s25, 1
      %p48 = por %p46, %p47
      %p50 = scmp.ne.s32.totalorder %s33, %s49
      %p51 = scmp.eq.s32.totalorder %s25, 0
      %p52 = por %p50, %p51
      %s54 = sadd.s32 %s53, 1
      %p57 = scmp.eq.s32.totalorder %s19, 1
      %p58 = scmp.ne.s32.totalorder %s53, %s55
      %p59 = scmp.eq.s32.totalorder %s19, 0
      %p60 = por %p58, %p59
      %p61 = scmp.ne.s32.totalorder %s53, %s55
      %p62 = scmp.eq.s32.totalorder %s24, 1
      %p63 = por %p61, %p62
      %p64 = scmp.ne.s32.totalorder %s55, %s56
      %p65 = scmp.eq.s32.totalorder %s24, 0
      %p66 = por %p64, %p65
      %p67 = scmp.ne.s32.totalorder %s55, %s56
      %p68 = scmp.eq.s32.totalorder %s25, 1
      %p69 = por %p67, %p68
      %p71 = scmp.ne.s32.totalorder %s56, %s70
      %p72 = scmp.eq.s32.totalorder %s25, 0
      %p73 = por %p71, %p72
      %s75 = sadd.s32 %s74, 1
      %p78 = scmp.eq.s32.totalorder %s19, 1
      %p79 = scmp.ne.s32.totalorder %s74, %s76
      %p80 = scmp.eq.s32.totalorder %s19, 0
      %p81 = por %p79, %p80
      %p82 = scmp.ne.s32.totalorder %s74, %s76
      %p83 = scmp.eq.s32.totalorder %s24, 1
      %p84 = por %p82, %p83
      %p85 = scmp.ne.s32.totalorder %s76, %s77
      %p86 = scmp.eq.s32.totalorder %s24, 0
      %p87 = por %p85, %p86
      %p88 = scmp.ne.s32.totalorder %s76, %s77
      %p89 = scmp.eq.s32.totalorder %s25, 1
      %p90 = por %p88, %p89
      %p92 = scmp.ne.s32.totalorder %s77, %s91
      %p93 = scmp.eq.s32.totalorder %s25, 0
      %p94 = por %p92, %p93
      %s96 = sadd.s32 %s95, 1
      %p99 = scmp.eq.s32.totalorder %s19, 1
      %p100 = scmp.ne.s32.totalorder %s95, %s97
      %p101 = scmp.eq.s32.totalorder %s19, 0
      %p102 = por %p100, %p101
      %p103 = scmp.ne.s32.totalorder %s95, %s97
      %p104 = scmp.eq.s32.totalorder %s24, 1
      %p105 = por %p103, %p104
      %p106 = scmp.ne.s32.totalorder %s97, %s98
      %p107 = scmp.eq.s32.totalorder %s24, 0
      %p108 = por %p106, %p107
      %p109 = scmp.ne.s32.totalorder %s97, %s98
      %p110 = scmp.eq.s32.totalorder %s25, 1
      %p111 = por %p109, %p110
      %p113 = scmp.ne.s32.totalorder %s98, %s112
      %p114 = scmp.eq.s32.totalorder %s25, 0
      %p115 = por %p113, %p114
      %s117 = sadd.s32 %s116, 1
      %p120 = scmp.eq.s32.totalorder %s19, 1
      %p121 = scmp.ne.s32.totalorder %s116, %s118
      %p122 = scmp.eq.s32.totalorder %s19, 0
      %p123 = por %p121, %p122
      %p124 = scmp.ne.s32.totalorder %s116, %s118
      %p125 = scmp.eq.s32.totalorder %s24, 1
      %p126 = por %p124, %p125
      %p127 = scmp.ne.s32.totalorder %s118, %s119
      %p128 = scmp.eq.s32.totalorder %s24, 0
      %p129 = por %p127, %p128
      %p130 = scmp.ne.s32.totalorder %s118, %s119
      %p131 = scmp.eq.s32.totalorder %s25, 1
      %p132 = por %p130, %p131
      %p134 = scmp.ne.s32.totalorder %s119, %s133
      %p135 = scmp.eq.s32.totalorder %s25, 0
      %p136 = por %p134, %p135
      %s137 = ssub.s32 %s19, %s26
      %p138 = scmp.eq.s32.totalorder %s137, 0
      %s140 = sadd.s32 %s139, 1
      %s141 = scalar_select %p138, %s139, %s140
      %p144 = pneg %p138
      %p145 = scmp.eq.s32.totalorder %s19, 1
      %p146 = por %p144, %p145
      %p147 = scmp.ne.s32.totalorder %s139, %s142
      %p148 = scmp.eq.s32.totalorder %s19, 0
      %p149 = por %p147, %p148
      %p150 = scmp.ne.s32.totalorder %s139, %s142
      %p151 = scmp.eq.s32.totalorder %s24, 1
      %p152 = por %p150, %p151
      %p153 = scmp.ne.s32.totalorder %s142, %s143
      %p154 = scmp.eq.s32.totalorder %s24, 0
      %p155 = por %p153, %p154
      %p156 = scmp.ne.s32.totalorder %s142, %s143
      %p157 = scmp.eq.s32.totalorder %s25, 1
      %p158 = por %p156, %p157
      %p160 = scmp.ne.s32.totalorder %s143, %s159
      %p161 = scmp.eq.s32.totalorder %s25, 0
      %p162 = por %p160, %p161
      %s163 = ssub.s32 %s19, %s26
      %p164 = scmp.eq.s32.totalorder %s163, 0
      %s166 = sadd.s32 %s165, 1
      %s167 = scalar_select %p164, %s165, %s166
      %p170 = pneg %p164
      %p171 = scmp.eq.s32.totalorder %s19, 1
      %p172 = por %p170, %p171
      %p173 = scmp.ne.s32.totalorder %s165, %s168
      %p174 = scmp.eq.s32.totalorder %s19, 0
      %p175 = por %p173, %p174
      %p176 = scmp.ne.s32.totalorder %s165, %s168
      %p177 = scmp.eq.s32.totalorder %s24, 1
      %p178 = por %p176, %p177
      %p179 = scmp.ne.s32.totalorder %s168, %s169
      %p180 = scmp.eq.s32.totalorder %s24, 0
      %p181 = por %p179, %p180
      %p182 = scmp.ne.s32.totalorder %s168, %s169
      %p183 = scmp.eq.s32.totalorder %s25, 1
      %p184 = por %p182, %p183
      %p186 = scmp.ne.s32.totalorder %s169, %s185
      %p187 = scmp.eq.s32.totalorder %s25, 0
      %p188 = por %p186, %p187
      %p189 = scmp.le.s32.totalorder 1, %s19
      %p190 = scmp.lt.s32.totalorder %s19, 3
      %p191 = pnand %p189, %p190
      %p192 = pneg %p191
      // Predicated region
      $region9: #{_se_fused.1} parent=5 // pred_check
        _
      $region10: #{_se_fused.1} parent=5 // pred_check_branch
        %194 = sbr.rel (%p191) target = $region12
      $region11: #{_se_fused.1} parent=5 // pred_region
        %s195 = ssub.s32 %s19, 1
        // Predicated region
        $region13: #{_se_fused.1} parent=11 // pred_check
          %p196 = pneg %p66
        $region14: #{_se_fused.1} parent=11 // pred_check_branch
          %198 = sbr.rel (%p196) target = $region16
        $region15: #{_se_fused.1} parent=11 // pred_region
          _
        $region16: #{_se_fused.1} parent=11 // pred_fallthru
          _
        // Predicated region
        $region17: #{_se_fused.1} parent=11 // pred_check
          %p199 = pneg %p87
        $region18: #{_se_fused.1} parent=11 // pred_check_branch
          %201 = sbr.rel (%p199) target = $region20
        $region19: #{_se_fused.1} parent=11 // pred_region
          _
        $region20: #{_se_fused.1} parent=11 // pred_fallthru
          _
        // Predicated region
        $region21: #{_se_fused.1} parent=11 // pred_check
          %p202 = pneg %p108
        $region22: #{_se_fused.1} parent=11 // pred_check_branch
          %204 = sbr.rel (%p202) target = $region24
        $region23: #{_se_fused.1} parent=11 // pred_region
          _
        $region24: #{_se_fused.1} parent=11 // pred_fallthru
          _
        // Predicated region
        $region25: #{_se_fused.1} parent=11 // pred_check
          %p205 = pneg %p129
        $region26: #{_se_fused.1} parent=11 // pred_check_branch
          %207 = sbr.rel (%p205) target = $region28
        $region27: #{_se_fused.1} parent=11 // pred_region
          _
        $region28: #{_se_fused.1} parent=11 // pred_fallthru
          _
      $region12: #{_se_fused.1} parent=5 // pred_fallthru
        _
      %p208 = scmp.lt.s32.totalorder %s19, 2
      // Predicated region
      $region29: #{_se_fused.1} parent=5 // pred_check
        %p209 = pneg %p208
      $region30: #{_se_fused.1} parent=5 // pred_check_branch
        %211 = sbr.rel (%p209) target = $region32
      $region31: #{_se_fused.1} parent=5 // pred_region
        // Predicated region
        $region33: #{_se_fused.1} parent=31 // pred_check
          %p212 = pneg %p39
        $region34: #{_se_fused.1} parent=31 // pred_check_branch
          %214 = sbr.rel (%p212) target = $region36
        $region35: #{_se_fused.1} parent=31 // pred_region
          %s215 = sand.u32 %s29, 1
          %s216 = scalar_lea.sflag [#allocation3], %s215
          %s217 = sand.u32 %s29, 1
          %s218 = smul.addr %s217, 32
          %s219 = scalar_lea.vmem [#allocation2], %s218
          %s221 = ssub.s32 512, 512
          %222 = vsyncadd %s216, %s221
          %s223 = smul.addr %s19, 4
          %s224 = smul.addr %s223, 128
          %s225 = scalar_lea.hbm %s0, %s224
          %s226 = sshll.u32 %s219, 4
          %s227 = int_to_ptr.vmem [resolvable:$true] %s226
          %232 = dma.hbm_to_vmem [thread:$0]  %s225, 512, %s227, %s216, 256, 256, 16
        $region36: #{_se_fused.1} parent=31 // pred_fallthru
          _
      $region32: #{_se_fused.1} parent=5 // pred_fallthru
        _
      %p233 = scmp.le.s32.totalorder 1, %s19
      %p234 = scmp.lt.s32.totalorder %s19, 3
      %p235 = pnand %p233, %p234
      %p236 = pneg %p235
      // Predicated region
      $region37: #{_se_fused.1} parent=5 // pred_check
        _
      $region38: #{_se_fused.1} parent=5 // pred_check_branch
        %238 = sbr.rel (%p235) target = $region40
      $region39: #{_se_fused.1} parent=5 // pred_region
        %s239 = ssub.s32 %s19, 1
        %s240 = sand.u32 %s32, 1
        %s241 = scalar_lea.sflag [#allocation3], %s240
        %s242 = sand.u32 %s32, 1
        %s243 = smul.addr %s242, 32
        %s244 = scalar_lea.vmem [#allocation2], %s243
        // Predicated region
        $region41: #{_se_fused.1} parent=39 // pred_check
          %p245 = pneg %p45
        $region42: #{_se_fused.1} parent=39 // pred_check_branch
          %247 = sbr.rel (%p245) target = $region44
        $region43: #{_se_fused.1} parent=39 // pred_region
          %248 = dma.done %s241, 512
        $region44: #{_se_fused.1} parent=39 // pred_fallthru
          _
        %s249 = sand.u32 %s32, 1
        %s250 = scalar_lea.sflag [#allocation3], %s249
        %s251 = sand.u32 %s32, 1
        %s252 = smul.addr %s251, 32
        %s253 = scalar_lea.vmem [#allocation2], %s252
        %p254 = pneg %p45
        %p255 = pneg %p42
        %p256 = pneg %p66
        %p257 = pneg %p63
        %p258 = pneg %p87
        %p259 = pneg %p84
        %p260 = pneg %p108
        %p261 = pneg %p105
        %p262 = pneg %p129
        %p263 = pneg %p126
        %p264 = pneg %p155
        %p265 = pneg %p152
        %s266 = sand.u32 %s142, 1
        %s267 = scalar_lea.sflag [#allocation4], %s266
        %s268 = sand.u32 %s142, 1
        %s269 = smul.addr %s268, 32
        %s270 = scalar_lea.vmem [#allocation5], %s269
        %p271 = pneg %p181
        %p272 = pneg %p178
        %p273 = scmp.lt.s32.totalorder %s24, 1
        %s274 = scalar_select %p273, %s24, 1
        %s275 = smul.addr %s274, 2
        %s276 = smul.addr %s275, 8
        %s277 = scalar_lea.vmem %s6, %s276
        %p278 = scmp.lt.s32.totalorder %s24, 1
        %s279 = scalar_select %p278, %s24, 1
        %s280 = smul.addr %s279, 2
        %s281 = smul.addr %s280, 8
        %s282 = scalar_lea.vmem %s6, %s281
        %v283 = vld [vmem:[%s244] sm:$0xff]
        %v284 = vld [vmem:[%s244 + $0x8] sm:$0xff]
        %v285 = vld [vmem:[%s244 + $0x10] sm:$0xff]
        %v286 = vld [vmem:[%s244 + $0x18] sm:$0xff]
        %v287 = vadd.f32 %v283, %v284
        %288 = vadd.xlane.f32.xlu0 %v287
        %v289 = vpop.xlane.xlu0 %288
        %v290 = vadd.f32 %v285, %v286
        %291 = vadd.xlane.f32.xlu0 %v290
        %v292 = vpop.xlane.xlu0 %291
        %v293 = vld [vmem:[%s1] sm:$0xff]
        %v294 = vld [vmem:[%s1 + $0x8] sm:$0xff]
        %v295 = vld [vmem:[%s2] sm:$0xff]
        %v296 = vld [vmem:[%s2 + $0x8] sm:$0xff]
        %vm297 = vcmask 130048
        %v299 = vsel %vm297, %v293, 0
        %v302 = vsel %vm297, %v294, 0
        %304 = vmatprep.subr.mxu0 0.0
        %305 = vmatpush1.msra.mxu0 %v289
        %306 = vmatprep.subr.mxu0 0.0
        %307 = vmatpush1.msra.mxu0 %v292
        %308 = vmatprep.subr.mxu0 0.0
        %309 = vmatpush1.msra.mxu0 0.0
        %310 = vmatprep.subr.mxu0 0.0
        %311 = vmatpush1.msra.mxu0 0.0
        %312 = vmatprep.subr.mxu0 0.0
        %313 = vmatpush1.msra.mxu0 0.0
        %314 = vmatprep.subr.mxu0 0.0
        %315 = vmatpush1.msra.mxu0 0.0
        %316 = vmatprep.subr.mxu0 0.0
        %317 = vmatpush1.msra.mxu0 0.0
        %318 = vmatprep.subr.mxu0 0.0
        %319 = vmatpush1.msra.mxu0 0.0
        %320 = vmatprep.subr.mxu0 0.0
        %321 = vmatpush1.msra.mxu0 0.0
        %322 = vmatprep.subr.mxu0 0.0
        %323 = vmatpush1.msra.mxu0 0.0
        %324 = vmatprep.subr.mxu0 0.0
        %325 = vmatpush1.msra.mxu0 0.0
        %326 = vmatprep.subr.mxu0 0.0
        %327 = vmatpush1.msra.mxu0 0.0
        %328 = vmatprep.subr.mxu0 0.0
        %329 = vmatpush1.msra.mxu0 0.0
        %330 = vmatprep.subr.mxu0 0.0
        %331 = vmatpush1.msra.mxu0 0.0
        %332 = vmatprep.subr.mxu0 0.0
        %333 = vmatpush1.msra.mxu0 0.0
        %334 = vmatprep.subr.mxu0 0.0
        %335 = vmatpush1.msra.mxu0 0.0
        %336 = vmatprep.subr.mxu0 0.0
        %337 = vmatpush1.msra.mxu0 0.0
        %338 = vmatprep.subr.mxu0 0.0
        %339 = vmatpush1.msra.mxu0 0.0
        %340 = vmatprep.subr.mxu0 0.0
        %341 = vmatpush1.msra.mxu0 0.0
        %342 = vmatprep.subr.mxu0 0.0
        %343 = vmatpush1.msra.mxu0 0.0
        %344 = vmatprep.subr.mxu0 0.0
        %345 = vmatpush1.msra.mxu0 0.0
        %346 = vmatprep.subr.mxu0 0.0
        %347 = vmatpush1.msra.mxu0 0.0
        %348 = vmatprep.subr.mxu0 0.0
        %349 = vmatpush1.msra.mxu0 0.0
        %350 = vmatprep.subr.mxu0 0.0
        %351 = vmatpush1.msra.mxu0 0.0
        %352 = vmatprep.subr.mxu0 0.0
        %353 = vmatpush1.msra.mxu0 0.0
        %354 = vmatprep.subr.mxu0 0.0
        %355 = vmatpush1.msra.mxu0 0.0
        %356 = vmatprep.subr.mxu0 0.0
        %357 = vmatpush1.msra.mxu0 0.0
        %358 = vmatprep.subr.mxu0 0.0
        %359 = vmatpush1.msra.mxu0 0.0
        %360 = vmatprep.subr.mxu0 0.0
        %361 = vmatpush1.msra.mxu0 0.0
        %362 = vmatprep.subr.mxu0 0.0
        %363 = vmatpush1.msra.mxu0 0.0
        %364 = vmatprep.subr.mxu0 0.0
        %365 = vmatpush1.msra.mxu0 0.0
        %366 = vmatprep.subr.mxu0 0.0
        %367 = vmatpush1.msra.mxu0 0.0
        %368 = vmatprep.mubr.f32.mxu0 0.0
        %369 = vmatmul.mubr.f32.gmra.mrb[0].mxu0 %v299
        %v370 = vpop.f32.mrb[0].mxu0
        %v371 = vadd.f32 %v295, %v370
        %v372 = vpop.f32.mrb[0].mxu0
        %373 = vmatprep.mubr.f32.mxu0 0.0
        %374 = vmatmul.mubr.f32.gmra.mrb[0].mxu0 %v302
        %v375 = vpop.f32.mrb[0].mxu0
        %v376 = vadd.f32 %v296, %v375
        %v377 = vpop.f32.mrb[0].mxu0
        %378 = vdwg.mxu0
        %v379 = vmax.f32 %v371, 0.0
        %v380 = vmax.f32 %v376, 0.0
        %v381 = vld [vmem:[%s3] sm:$0xff]
        %v382 = vld [vmem:[%s3 + $0x8] sm:$0xff]
        %v383 = vld [vmem:[%s4] sm:$0xff]
        %v384 = vld [vmem:[%s4 + $0x8] sm:$0xff]
        %v386 = vsel %vm297, %v381, 0
        %v389 = vsel %vm297, %v382, 0
        %391 = vmatprep.subr.mxu0 0.0
        %392 = vmatpush1.msra.mxu0 %v379
        %393 = vmatprep.subr.mxu0 0.0
        %394 = vmatpush1.msra.mxu0 %v380
        %395 = vmatprep.subr.mxu0 0.0
        %396 = vmatpush1.msra.mxu0 0.0
        %397 = vmatprep.subr.mxu0 0.0
        %398 = vmatpush1.msra.mxu0 0.0
        %399 = vmatprep.subr.mxu0 0.0
        %400 = vmatpush1.msra.mxu0 0.0
        %401 = vmatprep.subr.mxu0 0.0
        %402 = vmatpush1.msra.mxu0 0.0
        %403 = vmatprep.subr.mxu0 0.0
        %404 = vmatpush1.msra.mxu0 0.0
        %405 = vmatprep.subr.mxu0 0.0
        %406 = vmatpush1.msra.mxu0 0.0
        %407 = vmatprep.subr.mxu0 0.0
        %408 = vmatpush1.msra.mxu0 0.0
        %409 = vmatprep.subr.mxu0 0.0
        %410 = vmatpush1.msra.mxu0 0.0
        %411 = vmatprep.subr.mxu0 0.0
        %412 = vmatpush1.msra.mxu0 0.0
        %413 = vmatprep.subr.mxu0 0.0
        %414 = vmatpush1.msra.mxu0 0.0
        %415 = vmatprep.subr.mxu0 0.0
        %416 = vmatpush1.msra.mxu0 0.0
        %417 = vmatprep.subr.mxu0 0.0
        %418 = vmatpush1.msra.mxu0 0.0
        %419 = vmatprep.subr.mxu0 0.0
        %420 = vmatpush1.msra.mxu0 0.0
        %421 = vmatprep.subr.mxu0 0.0
        %422 = vmatpush1.msra.mxu0 0.0
        %423 = vmatprep.subr.mxu0 0.0
        %424 = vmatpush1.msra.mxu0 0.0
        %425 = vmatprep.subr.mxu0 0.0
        %426 = vmatpush1.msra.mxu0 0.0
        %427 = vmatprep.subr.mxu0 0.0
        %428 = vmatpush1.msra.mxu0 0.0
        %429 = vmatprep.subr.mxu0 0.0
        %430 = vmatpush1.msra.mxu0 0.0
        %431 = vmatprep.subr.mxu0 0.0
        %432 = vmatpush1.msra.mxu0 0.0
        %433 = vmatprep.subr.mxu0 0.0
        %434 = vmatpush1.msra.mxu0 0.0
        %435 = vmatprep.subr.mxu0 0.0
        %436 = vmatpush1.msra.mxu0 0.0
        %437 = vmatprep.subr.mxu0 0.0
        %438 = vmatpush1.msra.mxu0 0.0
        %439 = vmatprep.subr.mxu0 0.0
        %440 = vmatpush1.msra.mxu0 0.0
        %441 = vmatprep.subr.mxu0 0.0
        %442 = vmatpush1.msra.mxu0 0.0
        %443 = vmatprep.subr.mxu0 0.0
        %444 = vmatpush1.msra.mxu0 0.0
        %445 = vmatprep.subr.mxu0 0.0
        %446 = vmatpush1.msra.mxu0 0.0
        %447 = vmatprep.subr.mxu0 0.0
        %448 = vmatpush1.msra.mxu0 0.0
        %449 = vmatprep.subr.mxu0 0.0
        %450 = vmatpush1.msra.mxu0 0.0
        %451 = vmatprep.subr.mxu0 0.0
        %452 = vmatpush1.msra.mxu0 0.0
        %453 = vmatprep.subr.mxu0 0.0
        %454 = vmatpush1.msra.mxu0 0.0
        %455 = vmatprep.mubr.f32.mxu0 0.0
        %456 = vmatmul.mubr.f32.gmra.mrb[0].mxu0 %v386
        %v457 = vpop.f32.mrb[0].mxu0
        %v458 = vadd.f32 %v383, %v457
        %v459 = vpop.f32.mrb[0].mxu0
        %460 = vmatprep.mubr.f32.mxu0 0.0
        %461 = vmatmul.mubr.f32.gmra.mrb[0].mxu0 %v389
        %v462 = vpop.f32.mrb[0].mxu0
        %v463 = vadd.f32 %v384, %v462
        %v464 = vpop.f32.mrb[0].mxu0
        %465 = vdwg.mxu0
        %v466 = vxor.u32 %v458, 2147483648
        %v467 = vxor.u32 %v463, 2147483648
        %v468 = vmul.f32 %v466, 1.442695
        %v469 = vpow.pop %v468
        %v470 = vmul.f32 %v467, 1.442695
        %v471 = vpow.pop %v470
        %v472 = vadd.f32 %v469, 1.0
        %v473 = vadd.f32 %v471, 1.0
        %v474 = vrcp.pop %v472
        %v475 = vmul.f32 1.0, %v474
        %v476 = vrcp.pop %v473
        %v477 = vmul.f32 1.0, %v476
        %vm478 = vcmask 7168
        %479 = vst.msk [vmem:[%s282] sm:$0xff] %vm478, %v475
        %480 = vst.msk [vmem:[%s282 + $0x8] sm:$0xff] %vm478, %v477
        %482 = vset.pattern.permute.xlu0 0
        %483 = vperm.xlu0 %482, %v475
        %v484 = vpop.permute.xlu0 %483
        %487 = vset.pattern.permute.xlu0 0
        %488 = vperm.xlu0 %487, %v477
        %v489 = vpop.permute.xlu0 %488
        %v491 = vmul.f32 %v283, %v484
        %v492 = vmul.f32 %v284, %v484
        %v493 = vmul.f32 %v285, %v489
        %v494 = vmul.f32 %v286, %v489
        %495 = vst [vmem:[%s270] sm:$0xff] %v491
        %496 = vst [vmem:[%s270 + $0x8] sm:$0xff] %v492
        %497 = vst [vmem:[%s270 + $0x10] sm:$0xff] %v493
        %498 = vst [vmem:[%s270 + $0x18] sm:$0xff] %v494
        %s499 = sand.u32 %s142, 1
        %s500 = scalar_lea.sflag [#allocation4], %s499
        %s501 = sand.u32 %s142, 1
        %s502 = smul.addr %s501, 32
        %s503 = scalar_lea.vmem [#allocation5], %s502
        %p504 = scmp.lt.s32.totalorder %s24, 1
        %s505 = scalar_select %p504, %s24, 1
        %s506 = smul.addr %s505, 2
        %s507 = smul.addr %s506, 8
        %s508 = scalar_lea.vmem %s6, %s507
        // Predicated region
        $region45: #{_se_fused.1} parent=39 // pred_check
          %p509 = pneg %p152
        $region46: #{_se_fused.1} parent=39 // pred_check_branch
          %511 = sbr.rel (%p509) target = $region48
        $region47: #{_se_fused.1} parent=39 // pred_region
          %s513 = ssub.s32 512, 512
          %514 = vsyncadd %s500, %s513
          %s515 = smul.addr %s24, 4
          %s516 = smul.addr %s515, 128
          %s517 = scalar_lea.hbm %s5, %s516
          %s518 = sshll.u32 %s503, 4
          %s519 = int_to_ptr.vmem [resolvable:$true] %s518
          %524 = dma.vmem_to_hbm [thread:$0]  %s519, 512, %s517, %s500, 256, 256, 16
        $region48: #{_se_fused.1} parent=39 // pred_fallthru
          _
        // Predicated region
        $region49: #{_se_fused.1} parent=39 // pred_check
          %p525 = pneg %p178
        $region50: #{_se_fused.1} parent=39 // pred_check_branch
          %527 = sbr.rel (%p525) target = $region52
        $region51: #{_se_fused.1} parent=39 // pred_region
          _
        $region52: #{_se_fused.1} parent=39 // pred_fallthru
          _
      $region40: #{_se_fused.1} parent=5 // pred_fallthru
        _
      %p528 = scmp.le.s32.totalorder 2, %s19
      // Predicated region
      $region53: #{_se_fused.1} parent=5 // pred_check
        %p529 = pneg %p528
      $region54: #{_se_fused.1} parent=5 // pred_check_branch
        %531 = sbr.rel (%p529) target = $region56
      $region55: #{_se_fused.1} parent=5 // pred_region
        %s532 = ssub.s32 %s19, 2
        // Predicated region
        $region57: #{_se_fused.1} parent=55 // pred_check
          %p533 = pneg %p158
        $region58: #{_se_fused.1} parent=55 // pred_check_branch
          %535 = sbr.rel (%p533) target = $region60
        $region59: #{_se_fused.1} parent=55 // pred_region
          %s536 = sand.u32 %s143, 1
          %s537 = scalar_lea.sflag [#allocation4], %s536
          %s538 = sand.u32 %s143, 1
          %s539 = smul.addr %s538, 32
          %s540 = scalar_lea.vmem [#allocation5], %s539
          %541 = dma.done %s537, 512
        $region60: #{_se_fused.1} parent=55 // pred_fallthru
          _
        // Predicated region
        $region61: #{_se_fused.1} parent=55 // pred_check
          %p542 = pneg %p184
        $region62: #{_se_fused.1} parent=55 // pred_check_branch
          %544 = sbr.rel (%p542) target = $region64
        $region63: #{_se_fused.1} parent=55 // pred_region
          %p545 = scmp.lt.s32.totalorder %s25, 1
          %s546 = scalar_select %p545, %s25, 1
          %s547 = smul.addr %s546, 2
          %s548 = smul.addr %s547, 8
          %s549 = scalar_lea.vmem %s6, %s548
        $region64: #{_se_fused.1} parent=55 // pred_fallthru
          _
      $region56: #{_se_fused.1} parent=5 // pred_fallthru
        _
    $region6: #{_se_fused.1} parent=1 // loop_footer
      %s23 = sadd.s32 1, %s19
    $region7: #{_se_fused.1} parent=1 // loop_footer_branch
      %18 = sbr.rel target = $region3
    $region8: #{_se_fused.1} parent=1 // loop_exit
      _
    %550 = vsyncpa [#allocation3], 1
    %s551 = scalar_lea.sflag [#allocation3], 1
    %552 = vsyncpa %s551, 1
    %553 = vsyncpa [#allocation4], 1
    %s554 = scalar_lea.sflag [#allocation4], 1
    %555 = vsyncpa %s554, 1

</llo_original>
